<compile_context>
chip_gen: v5e
topology: v5e:2x2
jax: 0.10.0
libtpu: 0.0.40
codegen_flags: <defaults>
</compile_context>

<pallas_src>
import functools

import jax
import jax.numpy as jnp
from jax.experimental import pallas as pl
from jax.experimental.pallas import tpu as pltpu


def _round_up(x, m):
    return ((x + m - 1) // m) * m


def _generator_kernel(x_ref, w1_ref, b1_ref, w2_ref, b2_ref, w3_ref, b3_ref,
                      o_ref):
    """Fused 3-layer MLP forward for one (bm, input_dim) x (tn output cols) tile.

    Matmul operands are bf16 (MXU-native), accumulation is f32.  Bias-add,
    LeakyReLU and tanh run on the f32 results (VPU / EUP).
    """
    x = x_ref[...].astype(jnp.bfloat16)          # free VPU cast; no wrapper pad/copy

    # ---- layer 1: Linear(input_dim, 128) + LeakyReLU(0.2)
    h = jnp.dot(x, w1_ref[...], preferred_element_type=jnp.float32)
    h = h + b1_ref[...]                          # (bm, 128) + (1, 128)
    h = jnp.where(h > 0, h, 0.2 * h)

    # ---- layer 2: Linear(128, 256) + LeakyReLU(0.2)
    h = jnp.dot(h.astype(jnp.bfloat16), w2_ref[...],
                preferred_element_type=jnp.float32)
    h = h + b2_ref[...]
    h = jnp.where(h > 0, h, 0.2 * h)

    # ---- layer 3: Linear(256, output_dim tile) + Tanh
    h = jnp.dot(h.astype(jnp.bfloat16), w3_ref[...],
                preferred_element_type=jnp.float32)
    h = h + b3_ref[...]
    o_ref[...] = jnp.tanh(h).astype(o_ref.dtype)


def prepare_generator_params(params):
    """One-time param prep: cast weights to bf16, biases to f32, pad W3/b3 columns
    to a multiple of 128 (lane-dense output).  Call once and reuse per forward."""
    w1, b1 = params["w1"], params["b1"]
    w2, b2 = params["w2"], params["b2"]
    w3, b3 = params["w3"], params["b3"]
    output_dim = w3.shape[1]
    pad_out = _round_up(output_dim, 128)
    bf16 = jnp.bfloat16
    w3p = jnp.zeros((w3.shape[0], pad_out), bf16).at[:, :output_dim].set(
        w3.astype(bf16))
    b3p = jnp.zeros((1, pad_out), jnp.float32).at[:, :output_dim].set(
        b3.astype(jnp.float32))
    return {
        "w1": w1.astype(bf16), "b1": b1.astype(jnp.float32),
        "w2": w2.astype(bf16), "b2": b2.astype(jnp.float32),
        "w3": w3p, "b3": b3p,
        "output_dim": output_dim,   # python int (passed as a static arg below)
    }


@functools.partial(jax.jit, static_argnames=("output_dim", "block_m", "tile_n"))
def _generator_forward_impl(x, w1, b1, w2, b2, w3, b3, *,
                            output_dim, block_m, tile_n):
    batch, input_dim = x.shape
    hidden1 = w1.shape[1]            # 128
    hidden2 = w2.shape[1]            # 256
    pad_out = w3.shape[1]            # output_dim rounded up to 128

    # ---- output-column tiling (only when it divides evenly; keeps stores dense)
    tn = tile_n if (pad_out > tile_n and pad_out % tile_n == 0) else pad_out
    n_tiles = pad_out // tn

    # ---- batch tile: as big as the VMEM budget allows; pad batch, don't assert
    bm = _round_up(min(block_m, _round_up(batch, 8)), 8)

    def step_vmem_bytes(bm_):
        x_buf = 2 * bm_ * input_dim * 4                       # double-buffered f32 x
        out_buf = 2 * bm_ * tn * 4                            # double-buffered f32 out
        inter = bm_ * (hidden1 + hidden2 + tn) * 4 + bm_ * (hidden1 + hidden2) * 2
        w_buf = ((input_dim * hidden1 + hidden1 * hidden2 + 2 * hidden2 * tn) * 2
                 + (hidden1 + hidden2 + 2 * tn) * 4)
        return x_buf + out_buf + inter + w_buf

    # ~40 MiB budget: fits v7x (64 MiB physical/TC) and v5e (once the scoped limit
    # is raised via vmem_limit_bytes below).
    while bm > 256 and step_vmem_bytes(bm) > (40 << 20):
        bm = _round_up(bm // 2, 8)

    pad_batch = _round_up(batch, bm)
    m_tiles = pad_batch // bm
    # v7x megacore: keep >= 2 grid steps so ("parallel",...) can use both TCs.
    if m_tiles * n_tiles < 2 and batch >= 16:
        bm = _round_up(_round_up(batch, 8) // 2, 8)
        pad_batch = _round_up(batch, bm)
        m_tiles = pad_batch // bm

    # Conditional batch padding (f32; kernel casts to bf16 on the fly).
    xb = x if pad_batch == batch else jnp.pad(x, ((0, pad_batch - batch), (0, 0)))

    # Grid-invariant operands: resident in VMEM, single-buffered.
    def resident(shape):
        return pl.BlockSpec(shape, lambda i, j: (0,) * len(shape),
                            pipeline_mode=pl.Buffered(1))

    if n_tiles == 1:
        w3_spec, b3_spec = resident(w3.shape), resident(b3.shape)
    else:
        w3_spec = pl.BlockSpec((hidden2, tn), lambda i, j: (0, j))
        b3_spec = pl.BlockSpec((1, tn), lambda i, j: (0, j))

    flops = 2 * pad_batch * ((input_dim * hidden1 + hidden1 * hidden2) * n_tiles
                             + hidden2 * pad_out)
    transcendentals = pad_batch * pad_out                      # tanh
    bytes_accessed = (pad_batch * input_dim * 4
                      + (w1.size + w2.size + w3.size) * 2
                      + (b1.size + b2.size + b3.size) * 4
                      + pad_batch * pad_out * 4)

    vmem_limit = int(min(64 << 20, max(32 << 20, step_vmem_bytes(bm) + (8 << 20))))

    out = pl.pallas_call(
        _generator_kernel,
        out_shape=jax.ShapeDtypeStruct((pad_batch, pad_out), jnp.float32),
        grid_spec=pltpu.PrefetchScalarGridSpec(
            num_scalar_prefetch=0,
            grid=(m_tiles, n_tiles),
            in_specs=[
                # x tile: last block dim == full array dim -> legal even if < 128
                pl.BlockSpec((bm, input_dim), lambda i, j: (i, 0)),
                resident(w1.shape), resident(b1.shape),
                resident(w2.shape), resident(b2.shape),
                w3_spec, b3_spec,
            ],
            out_specs=pl.BlockSpec((bm, tn), lambda i, j: (i, j)),
        ),
        compiler_params=pltpu.CompilerParams(
            # Batch tiles and output-column tiles are independent -> megacore.
            dimension_semantics=("parallel", "parallel"),
            vmem_limit_bytes=vmem_limit,
        ),
        cost_estimate=pl.CostEstimate(
            flops=flops,
            transcendentals=transcendentals,
            bytes_accessed=bytes_accessed,
        ),
    )(xb, w1, b1, w2, b2, w3, b3)

    # Conditional slice: aligned shapes skip the extra output read+write.
    if pad_batch != batch or pad_out != output_dim:
        out = out[:batch, :output_dim]
    return out


def generator_forward(x, prepared, *, block_m=2048, tile_n=1024):
    """x: (batch, input_dim) f32; prepared: output of prepare_generator_params.
    Returns (batch, output_dim) f32."""
    return _generator_forward_impl(
        x, prepared["w1"], prepared["b1"], prepared["w2"], prepared["b2"],
        prepared["w3"], prepared["b3"],
        output_dim=prepared["output_dim"], block_m=block_m, tile_n=tile_n)


def init_generator_params(key, input_dim, output_dim):
    """Deterministic synthetic init mimicking PyTorch's U(-1/sqrt(fan_in), +) bound."""
    ks = jax.random.split(key, 6)

    def linear(kw, kb, fan_in, fan_out):
        bound = 1.0 / jnp.sqrt(fan_in)
        w = jax.random.uniform(kw, (fan_in, fan_out), jnp.float32, -bound, bound)
        b = jax.random.uniform(kb, (1, fan_out), jnp.float32, -bound, bound)
        return w, b

    w1, b1 = linear(ks[0], ks[1], input_dim, 128)
    w2, b2 = linear(ks[2], ks[3], 128, 256)
    w3, b3 = linear(ks[4], ks[5], 256, output_dim)
    return {"w1": w1, "b1": b1, "w2": w2, "b2": b2, "w3": w3, "b3": b3}


def _reference_forward(x, p):
    """Pure-JAX reference mirroring the kernel numerics (bf16 MXU inputs, f32 acc).

    NOTE: bf16 casting is a deliberate precision trade-off; vs. the pure-f32
    PyTorch module the post-tanh error is ~1e-2.
    """
    bf16 = jnp.bfloat16
    h = jnp.dot(x.astype(bf16), p["w1"].astype(bf16),
                preferred_element_type=jnp.float32) + p["b1"]
    h = jnp.where(h > 0, h, 0.2 * h)
    h = jnp.dot(h.astype(bf16), p["w2"].astype(bf16),
                preferred_element_type=jnp.float32) + p["b2"]
    h = jnp.where(h > 0, h, 0.2 * h)
    h = jnp.dot(h.astype(bf16), p["w3"].astype(bf16),
                preferred_element_type=jnp.float32) + p["b3"]
    return jnp.tanh(h)


if __name__ == "__main__":
    key = jax.random.PRNGKey(0)
    k_params, k_x1, k_x2 = jax.random.split(key, 3)

    input_dim, output_dim = 32, 64
    params = init_generator_params(k_params, input_dim, output_dim)
    prepared = prepare_generator_params(params)   # one-time pad/cast, reused below

    # --- small case: single grid step -----------------------------------------
    batch = 8
    x = jax.random.normal(k_x1, (batch, input_dim), dtype=jnp.float32)
    out = jax.block_until_ready(generator_forward(x, prepared))
    ref = _reference_forward(x, params)
    assert out.shape == (batch, output_dim)
    assert jnp.max(jnp.abs(out - ref)) < 2e-3

    # --- larger, non-divisible batch: default tile -> 2 grid steps (megacore) --
    batch2 = 300
    x2 = jax.random.normal(k_x2, (batch2, input_dim), dtype=jnp.float32)
    out2 = jax.block_until_ready(generator_forward(x2, prepared))
    ref2 = _reference_forward(x2, params)
    assert out2.shape == (batch2, output_dim)
    assert jnp.max(jnp.abs(out2 - ref2)) < 2e-3

    # --- same batch with a small forced tile: multi-step grid + batch padding --
    out3 = jax.block_until_ready(generator_forward(x2, prepared, block_m=128))
    assert out3.shape == (batch2, output_dim)
    assert jnp.max(jnp.abs(out3 - ref2)) < 2e-3

    print("KERNEL_OK")
</pallas_src>

<mosaic_0001>
module attributes {stable_mosaic.version = 11 : i64} {
  func.func @_generator_kernel(%arg0: i32, %arg1: i32, %arg2: memref<8x32xf32, #tpu.memory_space<vmem>>, %arg3: memref<32x128xbf16, #tpu.memory_space<vmem>>, %arg4: memref<1x128xf32, #tpu.memory_space<vmem>>, %arg5: memref<128x256xbf16, #tpu.memory_space<vmem>>, %arg6: memref<1x256xf32, #tpu.memory_space<vmem>>, %arg7: memref<256x128xbf16, #tpu.memory_space<vmem>>, %arg8: memref<1x128xf32, #tpu.memory_space<vmem>>, %arg9: memref<8x128xf32, #tpu.memory_space<vmem>>) attributes {dimension_semantics = [#tpu.dimension_semantics<parallel>, #tpu.dimension_semantics<parallel>], iteration_bounds = array<i64: 1, 1>, scalar_prefetch = 0 : i64, scratch_operands = 0 : i64, tpu.core_type = #tpu.core_type<tc>, window_params = [{transform_indices = @transform_0, window_bounds = array<i64: 8, 32>}, {pipeline_mode = #tpu.pipeline_mode<synchronous>, transform_indices = @transform_1, window_bounds = array<i64: 32, 128>}, {pipeline_mode = #tpu.pipeline_mode<synchronous>, transform_indices = @transform_2, window_bounds = array<i64: 1, 128>}, {pipeline_mode = #tpu.pipeline_mode<synchronous>, transform_indices = @transform_3, window_bounds = array<i64: 128, 256>}, {pipeline_mode = #tpu.pipeline_mode<synchronous>, transform_indices = @transform_4, window_bounds = array<i64: 1, 256>}, {pipeline_mode = #tpu.pipeline_mode<synchronous>, transform_indices = @transform_5, window_bounds = array<i64: 256, 128>}, {pipeline_mode = #tpu.pipeline_mode<synchronous>, transform_indices = @transform_6, window_bounds = array<i64: 1, 128>}, {transform_indices = @transform_7, window_bounds = array<i64: 8, 128>}]} {
    %c0 = arith.constant 0 : index
    %c0_0 = arith.constant 0 : index
    %0 = vector.load %arg2[%c0, %c0_0] : memref<8x32xf32, #tpu.memory_space<vmem>>, vector<8x32xf32>
    %1 = arith.truncf %0 : vector<8x32xf32> to vector<8x32xbf16>
    %c0_1 = arith.constant 0 : index
    %c0_2 = arith.constant 0 : index
    %2 = vector.load %arg3[%c0_1, %c0_2] : memref<32x128xbf16, #tpu.memory_space<vmem>>, vector<32x128xbf16>
    %cst = arith.constant dense<0.000000e+00> : vector<8x128xf32>
    %3 = tpu.matmul %1, %2, %cst {dimension_numbers = #tpu.dot_dimension_numbers<[1], [0], [0], [1], [0, 0, 1, 1], [], []>} : vector<8x32xbf16>, vector<32x128xbf16>, vector<8x128xf32> -> vector<8x128xf32>
    %c0_3 = arith.constant 0 : index
    %c0_4 = arith.constant 0 : index
    %4 = vector.load %arg4[%c0_3, %c0_4] : memref<1x128xf32, #tpu.memory_space<vmem>>, vector<1x128xf32>
    %5 = vector.broadcast %4 : vector<1x128xf32> to vector<8x128xf32>
    %6 = arith.addf %3, %5 : vector<8x128xf32>
    %cst_5 = arith.constant 0.000000e+00 : f32
    %7 = vector.broadcast %cst_5 : f32 to vector<8x128xf32>
    %8 = arith.cmpf ogt, %6, %7 : vector<8x128xf32>
    %cst_6 = arith.constant 2.000000e-01 : f32
    %9 = vector.broadcast %cst_6 : f32 to vector<8x128xf32>
    %10 = arith.mulf %9, %6 : vector<8x128xf32>
    %11 = arith.select %8, %6, %10 : vector<8x128xi1>, vector<8x128xf32>
    %12 = arith.truncf %11 : vector<8x128xf32> to vector<8x128xbf16>
    %c0_7 = arith.constant 0 : index
    %c0_8 = arith.constant 0 : index
    %13 = vector.load %arg5[%c0_7, %c0_8] : memref<128x256xbf16, #tpu.memory_space<vmem>>, vector<128x256xbf16>
    %cst_9 = arith.constant dense<0.000000e+00> : vector<8x256xf32>
    %14 = tpu.matmul %12, %13, %cst_9 {dimension_numbers = #tpu.dot_dimension_numbers<[1], [0], [0], [1], [0, 0, 1, 1], [], []>} : vector<8x128xbf16>, vector<128x256xbf16>, vector<8x256xf32> -> vector<8x256xf32>
    %c0_10 = arith.constant 0 : index
    %c0_11 = arith.constant 0 : index
    %15 = vector.load %arg6[%c0_10, %c0_11] : memref<1x256xf32, #tpu.memory_space<vmem>>, vector<1x256xf32>
    %16 = vector.broadcast %15 : vector<1x256xf32> to vector<8x256xf32>
    %17 = arith.addf %14, %16 : vector<8x256xf32>
    %cst_12 = arith.constant 0.000000e+00 : f32
    %18 = vector.broadcast %cst_12 : f32 to vector<8x256xf32>
    %19 = arith.cmpf ogt, %17, %18 : vector<8x256xf32>
    %cst_13 = arith.constant 2.000000e-01 : f32
    %20 = vector.broadcast %cst_13 : f32 to vector<8x256xf32>
    %21 = arith.mulf %20, %17 : vector<8x256xf32>
    %22 = arith.select %19, %17, %21 : vector<8x256xi1>, vector<8x256xf32>
    %23 = arith.truncf %22 : vector<8x256xf32> to vector<8x256xbf16>
    %c0_14 = arith.constant 0 : index
    %c0_15 = arith.constant 0 : index
    %24 = vector.load %arg7[%c0_14, %c0_15] : memref<256x128xbf16, #tpu.memory_space<vmem>>, vector<256x128xbf16>
    %cst_16 = arith.constant dense<0.000000e+00> : vector<8x128xf32>
    %25 = tpu.matmul %23, %24, %cst_16 {dimension_numbers = #tpu.dot_dimension_numbers<[1], [0], [0], [1], [0, 0, 1, 1], [], []>} : vector<8x256xbf16>, vector<256x128xbf16>, vector<8x128xf32> -> vector<8x128xf32>
    %c0_17 = arith.constant 0 : index
    %c0_18 = arith.constant 0 : index
    %26 = vector.load %arg8[%c0_17, %c0_18] : memref<1x128xf32, #tpu.memory_space<vmem>>, vector<1x128xf32>
    %27 = vector.broadcast %26 : vector<1x128xf32> to vector<8x128xf32>
    %28 = arith.addf %25, %27 : vector<8x128xf32>
    %29 = math.tanh %28 : vector<8x128xf32>
    %c0_19 = arith.constant 0 : index
    %c0_20 = arith.constant 0 : index
    %30 = vector.load %arg9[%c0_19, %c0_20] : memref<8x128xf32, #tpu.memory_space<vmem>>, vector<8x128xf32>
    tpu.vector_store %arg9[%c0_19, %c0_20], %29 {strides = array<i32>} : memref<8x128xf32, #tpu.memory_space<vmem>>, vector<8x128xf32>,
    return
  }
  func.func @transform_0(%arg0: i32, %arg1: i32) -> (i32, i32) {
    %c0_i32 = arith.constant 0 : i32
    %c0_i32_0 = arith.constant 0 : i32
    return %arg0, %c0_i32 : i32, i32
  }
  func.func @transform_1(%arg0: i32, %arg1: i32) -> (i32, i32) {
    %c0_i32 = arith.constant 0 : i32
    %c0_i32_0 = arith.constant 0 : i32
    %c0_i32_1 = arith.constant 0 : i32
    return %c0_i32, %c0_i32_0 : i32, i32
  }
  func.func @transform_2(%arg0: i32, %arg1: i32) -> (i32, i32) {
    %c0_i32 = arith.constant 0 : i32
    %c0_i32_0 = arith.constant 0 : i32
    %c0_i32_1 = arith.constant 0 : i32
    return %c0_i32, %c0_i32_0 : i32, i32
  }
  func.func @transform_3(%arg0: i32, %arg1: i32) -> (i32, i32) {
    %c0_i32 = arith.constant 0 : i32
    %c0_i32_0 = arith.constant 0 : i32
    %c0_i32_1 = arith.constant 0 : i32
    return %c0_i32, %c0_i32_0 : i32, i32
  }
  func.func @transform_4(%arg0: i32, %arg1: i32) -> (i32, i32) {
    %c0_i32 = arith.constant 0 : i32
    %c0_i32_0 = arith.constant 0 : i32
    %c0_i32_1 = arith.constant 0 : i32
    return %c0_i32, %c0_i32_0 : i32, i32
  }
  func.func @transform_5(%arg0: i32, %arg1: i32) -> (i32, i32) {
    %c0_i32 = arith.constant 0 : i32
    %c0_i32_0 = arith.constant 0 : i32
    %c0_i32_1 = arith.constant 0 : i32
    return %c0_i32, %c0_i32_0 : i32, i32
  }
  func.func @transform_6(%arg0: i32, %arg1: i32) -> (i32, i32) {
    %c0_i32 = arith.constant 0 : i32
    %c0_i32_0 = arith.constant 0 : i32
    %c0_i32_1 = arith.constant 0 : i32
    return %c0_i32, %c0_i32_0 : i32, i32
  }
  func.func @transform_7(%arg0: i32, %arg1: i32) -> (i32, i32) {
    %c0_i32 = arith.constant 0 : i32
    return %arg0, %arg1 : i32, i32
  }
}

</mosaic_0001>

<llo_original>
// kernel: _generator_forward_impl.1
$region0: #{_generator_forward_impl.1}
  #allocation0 [shape = 'u32[]', space=smem, size = 0x4, offset = 0x4, fixed_abs, tag = 'smem constant byte address 0x4 - core index']
  #allocation1 [shape = 'u32[72,128]{1,0:T(1,128)}', space=vmem, size = 0x9000, scoped, tag = 'internal scratch']
  %s0 = inlined_call_operand.hbm [shape: f32[8,32], index: 0, kind: input, shape index: {}]
  %s1 = inlined_call_operand.hbm [shape: bf16[32,128], index: 1, kind: input, shape index: {}]
  %s2 = inlined_call_operand.vmem [shape: f32[1,128], index: 2, kind: input, shape index: {}]
  %s3 = inlined_call_operand.hbm [shape: bf16[128,256], index: 3, kind: input, shape index: {}]
  %s4 = inlined_call_operand.vmem [shape: f32[1,256], index: 4, kind: input, shape index: {}]
  %s5 = inlined_call_operand.hbm [shape: bf16[256,128], index: 5, kind: input, shape index: {}]
  %s6 = inlined_call_operand.vmem [shape: f32[1,128], index: 6, kind: input, shape index: {}]
  %s7 = inlined_call_operand.hbm [shape: f32[8,128], index: 7, kind: output, shape index: {}]
  %s8 = sld [smem:[#allocation0]]
  $region54: #{_generator_forward_impl.1} parent=0
    _
  %s10 = ssub.s32 1, %s8
  %s11 = scalar_select 0, %s10, %s8
  $region1: #{_generator_forward_impl.1} parent=0
    #allocation2 [shape = 'u8[4096]{0}', space=vmem, size = 0x1000, scoped, tag = 'input window, operand 0, single buffered']
    #allocation3 [shape = 's32[1]{0}', space=sflag, size = 0x4, scoped, tag = 'scoped memory for _generator_forward_impl.1']
    #allocation4 [shape = 's32[1]{0}', space=sflag, size = 0x4, scoped, tag = 'scoped memory for _generator_forward_impl.1']
    #allocation5 [shape = 'u8[8192]{0}', space=vmem, size = 0x2000, scoped, tag = 'input window, operand 1, single buffered']
    #allocation6 [shape = 's32[1]{0}', space=sflag, size = 0x4, scoped, tag = 'scoped memory for _generator_forward_impl.1']
    #allocation7 [shape = 'u8[65536]{0}', space=vmem, size = 0x10000, scoped, tag = 'input window, operand 3, single buffered']
    #allocation8 [shape = 'u8[65536]{0}', space=vmem, size = 0x10000, scoped, tag = 'input window, operand 5, single buffered']
    #allocation9 [shape = 's32[1]{0}', space=sflag, size = 0x4, scoped, tag = 'scoped memory for _generator_forward_impl.1']
    #allocation10 [shape = 'u8[4096]{0}', space=vmem, size = 0x1000, scoped, tag = 'output window, operand 0, single buffered']
    %12 = vsyncpa [#allocation3], 0
    %13 = vsyncpa [#allocation6], 0
    %14 = vsyncpa [#allocation9], 0
    %15 = vsyncpa [#allocation4], 0
    // Predicated region
    $region2: #{_generator_forward_impl.1} parent=1 // pred_check
      _
    $region3: #{_generator_forward_impl.1} parent=1 // pred_check_branch
      %17 = sbr.rel (0) target = $region5
    $region4: #{_generator_forward_impl.1} parent=1 // pred_region
      %19 = vsyncadd [#allocation3], 0
      %s21 = sshll.u32 %s0, 4
      %s22 = int_to_ptr.hbm [resolvable:$true] %s21
      %s23 = sshll.u32 [#allocation2], 4
      %s24 = int_to_ptr.vmem [resolvable:$true] %s23
      %26 = dma.hbm_to_vmem [thread:$0]  %s22, 128, %s24, [#allocation3]
    $region5: #{_generator_forward_impl.1} parent=1 // pred_fallthru
      _
    // Predicated region
    $region6: #{_generator_forward_impl.1} parent=1 // pred_check
      _
    $region7: #{_generator_forward_impl.1} parent=1 // pred_check_branch
      %28 = sbr.rel (0) target = $region9
    $region8: #{_generator_forward_impl.1} parent=1 // pred_region
      %30 = vsyncadd [#allocation6], 0
      %s31 = sshll.u32 %s1, 4
      %s32 = int_to_ptr.hbm [resolvable:$true] %s31
      %s33 = sshll.u32 [#allocation5], 4
      %s34 = int_to_ptr.vmem [resolvable:$true] %s33
      %39 = dma.hbm_to_vmem [thread:$0]  %s32, 256, %s34, [#allocation6], 64, 64, 4
    $region9: #{_generator_forward_impl.1} parent=1 // pred_fallthru
      _
    // Predicated region
    $region10: #{_generator_forward_impl.1} parent=1 // pred_check
      _
    $region11: #{_generator_forward_impl.1} parent=1 // pred_check_branch
      %41 = sbr.rel (0) target = $region13
    $region12: #{_generator_forward_impl.1} parent=1 // pred_region
      _
    $region13: #{_generator_forward_impl.1} parent=1 // pred_fallthru
      _
    // Predicated region
    $region14: #{_generator_forward_impl.1} parent=1 // pred_check
      _
    $region15: #{_generator_forward_impl.1} parent=1 // pred_check_branch
      %43 = sbr.rel (0) target = $region17
    $region16: #{_generator_forward_impl.1} parent=1 // pred_region
      %45 = vsyncadd [#allocation6], 0
      %s46 = sshll.u32 %s3, 4
      %s47 = int_to_ptr.hbm [resolvable:$true] %s46
      %s48 = sshll.u32 [#allocation7], 4
      %s49 = int_to_ptr.vmem [resolvable:$true] %s48
      %54 = dma.hbm_to_vmem [thread:$0]  %s47, 2048, %s49, [#allocation6], 128, 128, 8
    $region17: #{_generator_forward_impl.1} parent=1 // pred_fallthru
      _
    // Predicated region
    $region18: #{_generator_forward_impl.1} parent=1 // pred_check
      _
    $region19: #{_generator_forward_impl.1} parent=1 // pred_check_branch
      %56 = sbr.rel (0) target = $region21
    $region20: #{_generator_forward_impl.1} parent=1 // pred_region
      _
    $region21: #{_generator_forward_impl.1} parent=1 // pred_fallthru
      _
    // Predicated region
    $region22: #{_generator_forward_impl.1} parent=1 // pred_check
      _
    $region23: #{_generator_forward_impl.1} parent=1 // pred_check_branch
      %58 = sbr.rel (0) target = $region25
    $region24: #{_generator_forward_impl.1} parent=1 // pred_region
      %60 = vsyncadd [#allocation9], 0
      %s61 = sshll.u32 %s5, 4
      %s62 = int_to_ptr.hbm [resolvable:$true] %s61
      %s63 = sshll.u32 [#allocation8], 4
      %s64 = int_to_ptr.vmem [resolvable:$true] %s63
      %69 = dma.hbm_to_vmem [thread:$0]  %s62, 2048, %s64, [#allocation9], 64, 64, 4
    $region25: #{_generator_forward_impl.1} parent=1 // pred_fallthru
      _
    // Predicated region
    $region26: #{_generator_forward_impl.1} parent=1 // pred_check
      _
    $region27: #{_generator_forward_impl.1} parent=1 // pred_check_branch
      %71 = sbr.rel (0) target = $region29
    $region28: #{_generator_forward_impl.1} parent=1 // pred_region
      _
    $region29: #{_generator_forward_impl.1} parent=1 // pred_fallthru
      _
    // Predicated region
    $region30: #{_generator_forward_impl.1} parent=1 // pred_check
      _
    $region31: #{_generator_forward_impl.1} parent=1 // pred_check_branch
      %73 = sbr.rel (0) target = $region33
    $region32: #{_generator_forward_impl.1} parent=1 // pred_region
      %75 = dma.done [#allocation3], 128
    $region33: #{_generator_forward_impl.1} parent=1 // pred_fallthru
      _
    // Predicated region
    $region34: #{_generator_forward_impl.1} parent=1 // pred_check
      _
    $region35: #{_generator_forward_impl.1} parent=1 // pred_check_branch
      %77 = sbr.rel (0) target = $region37
    $region36: #{_generator_forward_impl.1} parent=1 // pred_region
      %79 = dma.done [#allocation6], 256
    $region37: #{_generator_forward_impl.1} parent=1 // pred_fallthru
      _
    // Predicated region
    $region38: #{_generator_forward_impl.1} parent=1 // pred_check
      _
    $region39: #{_generator_forward_impl.1} parent=1 // pred_check_branch
      %81 = sbr.rel (0) target = $region41
    $region40: #{_generator_forward_impl.1} parent=1 // pred_region
      %83 = dma.done [#allocation6], 2048
    $region41: #{_generator_forward_impl.1} parent=1 // pred_fallthru
      _
    // Predicated region
    $region42: #{_generator_forward_impl.1} parent=1 // pred_check
      _
    $region43: #{_generator_forward_impl.1} parent=1 // pred_check_branch
      %85 = sbr.rel (0) target = $region45
    $region44: #{_generator_forward_impl.1} parent=1 // pred_region
      %87 = dma.done [#allocation9], 2048
    $region45: #{_generator_forward_impl.1} parent=1 // pred_fallthru
      _
    %v89 = vld [vmem:[#allocation2] sm:$0xff]
    %v90 = vpack.c.bf16 %v89, %v89
    %v91 = vld [vmem:[#allocation5] sm:$0xf]
    %v92 = vld [vmem:[#allocation5 + $0x4] sm:$0xf]
    %v93 = vld [vmem:[#allocation5 + $0x8] sm:$0xf]
    %v94 = vld [vmem:[#allocation5 + $0xc] sm:$0xf]
    %v95 = vld [vmem:[%s2] sm:$0x1]
    %v97 = vperm.slane %v95, 0
    %v103 = vunpack.c.l.b16 %v91
    %v104 = vunpack.c.l.b16 %v92
    %v105 = vunpack.c.l.b16 %v93
    %v106 = vunpack.c.l.b16 %v94
    %v107 = vpack.c.b16 %v104, %v103
    %v108 = vpack.c.b16 %v106, %v105
    %vm111 = vcmask 261120
    %v113 = vsel %vm111, %v90, 0
    %115 = vmatpush.bf16.msra.mxu0 0
    %116 = vmatpush.bf16.msra.mxu0 0
    %117 = vmatpush.bf16.msra.mxu0 0
    %118 = vmatpush.bf16.msra.mxu0 0
    %119 = vmatpush.bf16.msra.mxu0 0
    %120 = vmatpush.bf16.msra.mxu0 0
    %121 = vmatpush.bf16.msra.mxu0 %v108
    %122 = vmatpush.bf16.msra.mxu0 %v107
    %123 = vmatmul.bf16.gmra.mxu0 %v113
    %v124 = vpop.f32.mrf.mxu0
    %v125 = vadd.f32 %v97, %v124
    %v126 = vpop.f32.mrf.mxu0
    %127 = vdwg.mxu0
    %vm128 = vcmp.gt.f32.partialorder %v125, 0.0
    %v129 = vmul.f32 %v125, 0.2
    %v130 = vsel %vm128, %v125, %v129
    %v131 = vpack.c.bf16 %v130, %v130
    %v132 = vld [vmem:[#allocation7] sm:$0xff]
    %v133 = vld [vmem:[#allocation7 + $0x8] sm:$0xff]
    %v134 = vld [vmem:[#allocation7 + $0x10] sm:$0xff]
    %v135 = vld [vmem:[#allocation7 + $0x18] sm:$0xff]
    %v136 = vld [vmem:[#allocation7 + $0x20] sm:$0xff]
    %v137 = vld [vmem:[#allocation7 + $0x28] sm:$0xff]
    %v138 = vld [vmem:[#allocation7 + $0x30] sm:$0xff]
    %v139 = vld [vmem:[#allocation7 + $0x38] sm:$0xff]
    %v140 = vld [vmem:[#allocation7 + $0x40] sm:$0xff]
    %v141 = vld [vmem:[#allocation7 + $0x48] sm:$0xff]
    %v142 = vld [vmem:[#allocation7 + $0x50] sm:$0xff]
    %v143 = vld [vmem:[#allocation7 + $0x58] sm:$0xff]
    %v144 = vld [vmem:[#allocation7 + $0x60] sm:$0xff]
    %v145 = vld [vmem:[#allocation7 + $0x68] sm:$0xff]
    %v146 = vld [vmem:[#allocation7 + $0x70] sm:$0xff]
    %v147 = vld [vmem:[#allocation7 + $0x78] sm:$0xff]
    %v148 = vld [vmem:[%s4] sm:$0x3]
    %v150 = vperm.slane %v148, 0
    %v151 = vperm.slane %v148, 1
    %v170 = vunpack.c.l.b16 %v132
    %v171 = vunpack.c.h.b16 %v132
    %v172 = vunpack.c.l.b16 %v133
    %v173 = vunpack.c.h.b16 %v133
    %v174 = vunpack.c.l.b16 %v134
    %v175 = vunpack.c.h.b16 %v134
    %v176 = vunpack.c.l.b16 %v135
    %v177 = vunpack.c.h.b16 %v135
    %v178 = vunpack.c.l.b16 %v136
    %v179 = vunpack.c.h.b16 %v136
    %v180 = vunpack.c.l.b16 %v137
    %v181 = vunpack.c.h.b16 %v137
    %v182 = vunpack.c.l.b16 %v138
    %v183 = vunpack.c.h.b16 %v138
    %v184 = vunpack.c.l.b16 %v139
    %v185 = vunpack.c.h.b16 %v139
    %v186 = vunpack.c.l.b16 %v140
    %v187 = vunpack.c.h.b16 %v140
    %v188 = vunpack.c.l.b16 %v141
    %v189 = vunpack.c.h.b16 %v141
    %v190 = vunpack.c.l.b16 %v142
    %v191 = vunpack.c.h.b16 %v142
    %v192 = vunpack.c.l.b16 %v143
    %v193 = vunpack.c.h.b16 %v143
    %v194 = vunpack.c.l.b16 %v144
    %v195 = vunpack.c.h.b16 %v144
    %v196 = vunpack.c.l.b16 %v145
    %v197 = vunpack.c.h.b16 %v145
    %v198 = vunpack.c.l.b16 %v146
    %v199 = vunpack.c.h.b16 %v146
    %v200 = vunpack.c.l.b16 %v147
    %v201 = vunpack.c.h.b16 %v147
    %v202 = vpack.c.b16 %v172, %v170
    %v203 = vpack.c.b16 %v173, %v171
    %v204 = vpack.c.b16 %v176, %v174
    %v205 = vpack.c.b16 %v177, %v175
    %v206 = vpack.c.b16 %v180, %v178
    %v207 = vpack.c.b16 %v181, %v179
    %v208 = vpack.c.b16 %v184, %v182
    %v209 = vpack.c.b16 %v185, %v183
    %v210 = vpack.c.b16 %v188, %v186
    %v211 = vpack.c.b16 %v189, %v187
    %v212 = vpack.c.b16 %v192, %v190
    %v213 = vpack.c.b16 %v193, %v191
    %v214 = vpack.c.b16 %v196, %v194
    %v215 = vpack.c.b16 %v197, %v195
    %v216 = vpack.c.b16 %v200, %v198
    %v217 = vpack.c.b16 %v201, %v199
    %234 = vmatpush.bf16.msra.mxu0 %v216
    %235 = vmatpush.bf16.msra.mxu0 %v214
    %236 = vmatpush.bf16.msra.mxu0 %v212
    %237 = vmatpush.bf16.msra.mxu0 %v210
    %238 = vmatpush.bf16.msra.mxu0 %v208
    %239 = vmatpush.bf16.msra.mxu0 %v206
    %240 = vmatpush.bf16.msra.mxu0 %v204
    %241 = vmatpush.bf16.msra.mxu0 %v202
    %242 = vmatmul.bf16.gmra.mxu0 %v131
    %v243 = vpop.f32.mrf.mxu0
    %v244 = vadd.f32 %v150, %v243
    %v245 = vpop.f32.mrf.mxu0
    %246 = vdwg.mxu0
    %247 = vmatpush.bf16.msra.mxu0 %v217
    %248 = vmatpush.bf16.msra.mxu0 %v215
    %249 = vmatpush.bf16.msra.mxu0 %v213
    %250 = vmatpush.bf16.msra.mxu0 %v211
    %251 = vmatpush.bf16.msra.mxu0 %v209
    %252 = vmatpush.bf16.msra.mxu0 %v207
    %253 = vmatpush.bf16.msra.mxu0 %v205
    %254 = vmatpush.bf16.msra.mxu0 %v203
    %255 = vmatmul.bf16.gmra.mxu0 %v131
    %v256 = vpop.f32.mrf.mxu0
    %v257 = vadd.f32 %v151, %v256
    %v258 = vpop.f32.mrf.mxu0
    %259 = vdwg.mxu0
    %vm260 = vcmp.gt.f32.partialorder %v244, 0.0
    %vm261 = vcmp.gt.f32.partialorder %v257, 0.0
    %v262 = vmul.f32 %v244, 0.2
    %v263 = vmul.f32 %v257, 0.2
    %v264 = vsel %vm260, %v244, %v262
    %v265 = vsel %vm261, %v257, %v263
    %v266 = vpack.c.bf16 %v264, %v264
    %v267 = vpack.c.bf16 %v265, %v265
    %v268 = vld [vmem:[#allocation8] sm:$0xf]
    %v269 = vld [vmem:[#allocation8 + $0x4] sm:$0xf]
    %v270 = vld [vmem:[#allocation8 + $0x8] sm:$0xf]
    %v271 = vld [vmem:[#allocation8 + $0xc] sm:$0xf]
    %v272 = vld [vmem:[#allocation8 + $0x10] sm:$0xf]
    %v273 = vld [vmem:[#allocation8 + $0x14] sm:$0xf]
    %v274 = vld [vmem:[#allocation8 + $0x18] sm:$0xf]
    %v275 = vld [vmem:[#allocation8 + $0x1c] sm:$0xf]
    %v276 = vld [vmem:[#allocation8 + $0x20] sm:$0xf]
    %v277 = vld [vmem:[#allocation8 + $0x24] sm:$0xf]
    %v278 = vld [vmem:[#allocation8 + $0x28] sm:$0xf]
    %v279 = vld [vmem:[#allocation8 + $0x2c] sm:$0xf]
    %v280 = vld [vmem:[#allocation8 + $0x30] sm:$0xf]
    %v281 = vld [vmem:[#allocation8 + $0x34] sm:$0xf]
    %v282 = vld [vmem:[#allocation8 + $0x38] sm:$0xf]
    %v283 = vld [vmem:[#allocation8 + $0x3c] sm:$0xf]
    %v284 = vld [vmem:[#allocation8 + $0x40] sm:$0xf]
    %v285 = vld [vmem:[#allocation8 + $0x44] sm:$0xf]
    %v286 = vld [vmem:[#allocation8 + $0x48] sm:$0xf]
    %v287 = vld [vmem:[#allocation8 + $0x4c] sm:$0xf]
    %v288 = vld [vmem:[#allocation8 + $0x50] sm:$0xf]
    %v289 = vld [vmem:[#allocation8 + $0x54] sm:$0xf]
    %v290 = vld [vmem:[#allocation8 + $0x58] sm:$0xf]
    %v291 = vld [vmem:[#allocation8 + $0x5c] sm:$0xf]
    %v292 = vld [vmem:[#allocation8 + $0x60] sm:$0xf]
    %v293 = vld [vmem:[#allocation8 + $0x64] sm:$0xf]
    %v294 = vld [vmem:[#allocation8 + $0x68] sm:$0xf]
    %v295 = vld [vmem:[#allocation8 + $0x6c] sm:$0xf]
    %v296 = vld [vmem:[#allocation8 + $0x70] sm:$0xf]
    %v297 = vld [vmem:[#allocation8 + $0x74] sm:$0xf]
    %v298 = vld [vmem:[#allocation8 + $0x78] sm:$0xf]
    %v299 = vld [vmem:[#allocation8 + $0x7c] sm:$0xf]
    %v300 = vld [vmem:[%s6] sm:$0x1]
    %v302 = vperm.slane %v300, 0
    %v336 = vunpack.c.l.b16 %v268
    %v337 = vunpack.c.l.b16 %v269
    %v338 = vunpack.c.l.b16 %v270
    %v339 = vunpack.c.l.b16 %v271
    %v340 = vunpack.c.l.b16 %v272
    %v341 = vunpack.c.l.b16 %v273
    %v342 = vunpack.c.l.b16 %v274
    %v343 = vunpack.c.l.b16 %v275
    %v344 = vunpack.c.l.b16 %v276
    %v345 = vunpack.c.l.b16 %v277
    %v346 = vunpack.c.l.b16 %v278
    %v347 = vunpack.c.l.b16 %v279
    %v348 = vunpack.c.l.b16 %v280
    %v349 = vunpack.c.l.b16 %v281
    %v350 = vunpack.c.l.b16 %v282
    %v351 = vunpack.c.l.b16 %v283
    %v352 = vunpack.c.l.b16 %v284
    %v353 = vunpack.c.l.b16 %v285
    %v354 = vunpack.c.l.b16 %v286
    %v355 = vunpack.c.l.b16 %v287
    %v356 = vunpack.c.l.b16 %v288
    %v357 = vunpack.c.l.b16 %v289
    %v358 = vunpack.c.l.b16 %v290
    %v359 = vunpack.c.l.b16 %v291
    %v360 = vunpack.c.l.b16 %v292
    %v361 = vunpack.c.l.b16 %v293
    %v362 = vunpack.c.l.b16 %v294
    %v363 = vunpack.c.l.b16 %v295
    %v364 = vunpack.c.l.b16 %v296
    %v365 = vunpack.c.l.b16 %v297
    %v366 = vunpack.c.l.b16 %v298
    %v367 = vunpack.c.l.b16 %v299
    %v368 = vpack.c.b16 %v337, %v336
    %v369 = vpack.c.b16 %v339, %v338
    %v370 = vpack.c.b16 %v341, %v340
    %v371 = vpack.c.b16 %v343, %v342
    %v372 = vpack.c.b16 %v345, %v344
    %v373 = vpack.c.b16 %v347, %v346
    %v374 = vpack.c.b16 %v349, %v348
    %v375 = vpack.c.b16 %v351, %v350
    %v376 = vpack.c.b16 %v353, %v352
    %v377 = vpack.c.b16 %v355, %v354
    %v378 = vpack.c.b16 %v357, %v356
    %v379 = vpack.c.b16 %v359, %v358
    %v380 = vpack.c.b16 %v361, %v360
    %v381 = vpack.c.b16 %v363, %v362
    %v382 = vpack.c.b16 %v365, %v364
    %v383 = vpack.c.b16 %v367, %v366
    %400 = vmatpush.bf16.msra.mxu0 %v375
    %401 = vmatpush.bf16.msra.mxu0 %v374
    %402 = vmatpush.bf16.msra.mxu0 %v373
    %403 = vmatpush.bf16.msra.mxu0 %v372
    %404 = vmatpush.bf16.msra.mxu0 %v371
    %405 = vmatpush.bf16.msra.mxu0 %v370
    %406 = vmatpush.bf16.msra.mxu0 %v369
    %407 = vmatpush.bf16.msra.mxu0 %v368
    %408 = vmatmul.bf16.gmra.mxu0 %v266
    %v409 = vpop.f32.mrf.mxu0
    %v410 = vadd.f32 %v302, %v409
    %v411 = vpop.f32.mrf.mxu0
    %412 = vdwg.mxu0
    %413 = vmatpush.bf16.msra.mxu0 %v383
    %414 = vmatpush.bf16.msra.mxu0 %v382
    %415 = vmatpush.bf16.msra.mxu0 %v381
    %416 = vmatpush.bf16.msra.mxu0 %v380
    %417 = vmatpush.bf16.msra.mxu0 %v379
    %418 = vmatpush.bf16.msra.mxu0 %v378
    %419 = vmatpush.bf16.msra.mxu0 %v377
    %420 = vmatpush.bf16.msra.mxu0 %v376
    %421 = vmatmul.bf16.gmra.mxu0 %v267
    %v422 = vpop.f32.mrf.mxu0
    %v423 = vadd.f32 %v410, %v422
    %v424 = vpop.f32.mrf.mxu0
    %425 = vdwg.mxu0
    %v426 = vtanh.pop %v423
    %427 = vst [vmem:[#allocation10] sm:$0xff] %v426
    // Predicated region
    $region46: #{_generator_forward_impl.1} parent=1 // pred_check
      _
    $region47: #{_generator_forward_impl.1} parent=1 // pred_check_branch
      %429 = sbr.rel (0) target = $region49
    $region48: #{_generator_forward_impl.1} parent=1 // pred_region
      %431 = vsyncadd [#allocation4], 0
      %s433 = sshll.u32 [#allocation10], 4
      %s434 = int_to_ptr.vmem [resolvable:$true] %s433
      %s435 = sshll.u32 %s7, 4
      %s436 = int_to_ptr.hbm [resolvable:$true] %s435
      %438 = dma.vmem_to_hbm [thread:$0]  %s434, 128, %s436, [#allocation4]
    $region49: #{_generator_forward_impl.1} parent=1 // pred_fallthru
      _
    // Predicated region
    $region50: #{_generator_forward_impl.1} parent=1 // pred_check
      _
    $region51: #{_generator_forward_impl.1} parent=1 // pred_check_branch
      %440 = sbr.rel (0) target = $region53
    $region52: #{_generator_forward_impl.1} parent=1 // pred_region
      %442 = dma.done [#allocation4], 128
    $region53: #{_generator_forward_impl.1} parent=1 // pred_fallthru
      _
    %443 = vsyncpa [#allocation3], 1
    %444 = vsyncpa [#allocation6], 1
    %445 = vsyncpa [#allocation9], 1
    %446 = vsyncpa [#allocation4], 1

</llo_original>
